<compile_context>
chip_gen: v7x
topology: tpu7x:2x2x1
jax: 0.10.0
libtpu: 0.0.40
codegen_flags: <defaults>
</compile_context>

<pallas_src>
import jax
import jax.numpy as jnp
from jax.experimental import pallas as pl
from jax.experimental.pallas import tpu as pltpu


def _round_up(n, m):
    return ((n + m - 1) // m) * m


def gamma_logprob_kernel(xr_ref, cm1_ref, rate_ref, const_ref, o_ref):
    """Dense elementwise Gamma log-prob on a flat (TN, TDM) tile.

    xr_ref:    (TN, TDM)  x, already replicated along the multiplicity axis
    cm1_ref:   (1, TDM)   concentration - 1          (flattened [D*M], padded)
    rate_ref:  (1, TDM)   rate
    const_ref: (1, TDM)   c*log(rate) - lgamma(c)
    o_ref:     (TN, TDM)  log-probabilities
    """
    xr = xr_ref[...]
    # (1, TDM) params broadcast along sublanes against the (TN, TDM) tile.
    o_ref[...] = (cm1_ref[...] * jnp.log(xr)
                  - rate_ref[...] * xr
                  + const_ref[...])


def gamma_forward(x, concentration, rate):
    """Pallas-backed forward of the Gamma leaf layer.

    Args:
      x:             [N, D] float32, strictly positive (Gamma support).
      concentration: [1, D, M] float32 (as in the PyTorch module).
      rate:          [1, D, M] float32.

    Returns:
      [N, D, M] float32 log-probabilities.
    """
    N, D = x.shape
    M = concentration.shape[-1]
    dm = D * M

    # ---- parameter-only precompute (tiny; plain JAX glue) ----
    c = concentration.reshape(dm).astype(jnp.float32)
    r = rate.reshape(dm).astype(jnp.float32)
    const = c * jnp.log(r) - jax.lax.lgamma(c)   # c*log(rate) - lgamma(c)
    cm1 = c - 1.0

    # ---- tiling: lane-dense last dim (multiple of 128), batch tiles over N ----
    TDM = min(2048, _round_up(dm, 128))
    dm_pad = _round_up(dm, TDM)
    TN = min(512, _round_up(N, 8))
    n_pad = _round_up(N, TN)

    def pad_param(p):
        return jnp.zeros((1, dm_pad), jnp.float32).at[0, :dm].set(p)

    cm1_p = pad_param(cm1)
    rate_p = pad_param(r)
    const_p = pad_param(const)

    # Pre-expand x to the flat [N, D*M] layout (each feature repeated M times),
    # padded with 1.0 (log(1) = 0) so padded lanes/rows stay finite.
    xr = jnp.repeat(x.astype(jnp.float32), M, axis=1)                  # [N, D*M]
    xr = jnp.pad(xr, ((0, n_pad - N), (0, dm_pad - dm)), constant_values=1.0)

    grid = (n_pad // TN, dm_pad // TDM)

    out_flat = pl.pallas_call(
        gamma_logprob_kernel,
        out_shape=jax.ShapeDtypeStruct((n_pad, dm_pad), jnp.float32),
        grid=grid,
        in_specs=[
            pl.BlockSpec((TN, TDM), lambda i, j: (i, j)),   # x (replicated)
            pl.BlockSpec((1, TDM), lambda i, j: (0, j)),    # c - 1
            pl.BlockSpec((1, TDM), lambda i, j: (0, j)),    # rate
            pl.BlockSpec((1, TDM), lambda i, j: (0, j)),    # c*log(r) - lgamma(c)
        ],
        out_specs=pl.BlockSpec((TN, TDM), lambda i, j: (i, j)),
        compiler_params=pltpu.CompilerParams(
            dimension_semantics=("parallel", "parallel"),
            vmem_limit_bytes=32 * 1024 * 1024,
        ),
        cost_estimate=pl.CostEstimate(
            flops=3 * n_pad * dm_pad,
            transcendentals=n_pad * dm_pad,
            bytes_accessed=4 * (2 * n_pad * dm_pad + 3 * dm_pad),
        ),
    )(xr, cm1_p, rate_p, const_p)

    return out_flat[:N, :dm].reshape(N, D, M)


def gamma_forward_ref(x, concentration, rate):
    """Pure-JAX reference (mirrors torch.distributions.Gamma.log_prob)."""
    c = concentration.astype(jnp.float32)          # [1, D, M]
    r = rate.astype(jnp.float32)                   # [1, D, M]
    xb = x.astype(jnp.float32)[:, :, None]         # [N, D, 1]
    return (c * jnp.log(r)
            + (c - 1.0) * jnp.log(xb)
            - r * xb
            - jax.lax.lgamma(c))


if __name__ == "__main__":
    fwd = jax.jit(gamma_forward)

    # (N, D, M): D*M == 128 (no padding), D*M == 60 (lane padding),
    #            N == 1030 (multi-tile grid over the batch + row padding).
    configs = [(8, 16, 8), (16, 10, 6), (1030, 16, 8)]

    for (N, D, M) in configs:
        key = jax.random.PRNGKey(0)
        kx, kc, kr = jax.random.split(key, 3)

        # Gamma support is x > 0.
        x = jax.random.uniform(kx, (N, D), dtype=jnp.float32,
                               minval=0.1, maxval=3.0)
        # "torch.rand(1, in_features, multiplicity)" equivalents, kept away
        # from 0 so rate/concentration stay well-conditioned.
        concentration = jax.random.uniform(kc, (1, D, M), dtype=jnp.float32,
                                           minval=0.05, maxval=1.0)
        rate = jax.random.uniform(kr, (1, D, M), dtype=jnp.float32,
                                  minval=0.05, maxval=1.0)

        out = jax.block_until_ready(fwd(x, concentration, rate))
        ref = gamma_forward_ref(x, concentration, rate)

        assert out.shape == (N, D, M), (out.shape, (N, D, M))
        max_err = jnp.max(jnp.abs(out - ref))
        assert jnp.allclose(out, ref, atol=1e-4, rtol=1e-4), \
            f"config {(N, D, M)}: max abs err = {max_err}"

    print("KERNEL_OK")
</pallas_src>

<mosaic_0001>
module attributes {stable_mosaic.version = 11 : i64} {
  func.func @gamma_logprob_kernel(%arg0: i32, %arg1: i32, %arg2: memref<8x128xf32, #tpu.memory_space<vmem>>, %arg3: memref<1x128xf32, #tpu.memory_space<vmem>>, %arg4: memref<1x128xf32, #tpu.memory_space<vmem>>, %arg5: memref<1x128xf32, #tpu.memory_space<vmem>>, %arg6: memref<8x128xf32, #tpu.memory_space<vmem>>) attributes {dimension_semantics = [#tpu.dimension_semantics<parallel>, #tpu.dimension_semantics<parallel>], iteration_bounds = array<i64: 1, 1>, scalar_prefetch = 0 : i64, scratch_operands = 0 : i64, tpu.core_type = #tpu.core_type<tc>, window_params = [{transform_indices = @transform_0, window_bounds = array<i64: 8, 128>}, {transform_indices = @transform_1, window_bounds = array<i64: 1, 128>}, {transform_indices = @transform_2, window_bounds = array<i64: 1, 128>}, {transform_indices = @transform_3, window_bounds = array<i64: 1, 128>}, {transform_indices = @transform_4, window_bounds = array<i64: 8, 128>}]} {
    %c0 = arith.constant 0 : index
    %c0_0 = arith.constant 0 : index
    %0 = vector.load %arg2[%c0, %c0_0] : memref<8x128xf32, #tpu.memory_space<vmem>>, vector<8x128xf32>
    %c0_1 = arith.constant 0 : index
    %c0_2 = arith.constant 0 : index
    %1 = vector.load %arg3[%c0_1, %c0_2] : memref<1x128xf32, #tpu.memory_space<vmem>>, vector<1x128xf32>
    %2 = math.log %0 : vector<8x128xf32>
    %3 = vector.broadcast %1 : vector<1x128xf32> to vector<8x128xf32>
    %4 = arith.mulf %3, %2 : vector<8x128xf32>
    %c0_3 = arith.constant 0 : index
    %c0_4 = arith.constant 0 : index
    %5 = vector.load %arg4[%c0_3, %c0_4] : memref<1x128xf32, #tpu.memory_space<vmem>>, vector<1x128xf32>
    %6 = vector.broadcast %5 : vector<1x128xf32> to vector<8x128xf32>
    %7 = arith.mulf %6, %0 : vector<8x128xf32>
    %8 = arith.subf %4, %7 : vector<8x128xf32>
    %c0_5 = arith.constant 0 : index
    %c0_6 = arith.constant 0 : index
    %9 = vector.load %arg5[%c0_5, %c0_6] : memref<1x128xf32, #tpu.memory_space<vmem>>, vector<1x128xf32>
    %10 = vector.broadcast %9 : vector<1x128xf32> to vector<8x128xf32>
    %11 = arith.addf %8, %10 : vector<8x128xf32>
    %c0_7 = arith.constant 0 : index
    %c0_8 = arith.constant 0 : index
    %12 = vector.load %arg6[%c0_7, %c0_8] : memref<8x128xf32, #tpu.memory_space<vmem>>, vector<8x128xf32>
    tpu.vector_store %arg6[%c0_7, %c0_8], %11 {strides = array<i32>} : memref<8x128xf32, #tpu.memory_space<vmem>>, vector<8x128xf32>,
    return
  }
  func.func @transform_0(%arg0: i32, %arg1: i32) -> (i32, i32) {
    %c0_i32 = arith.constant 0 : i32
    return %arg0, %arg1 : i32, i32
  }
  func.func @transform_1(%arg0: i32, %arg1: i32) -> (i32, i32) {
    %c0_i32 = arith.constant 0 : i32
    %c0_i32_0 = arith.constant 0 : i32
    return %c0_i32, %arg1 : i32, i32
  }
  func.func @transform_2(%arg0: i32, %arg1: i32) -> (i32, i32) {
    %c0_i32 = arith.constant 0 : i32
    %c0_i32_0 = arith.constant 0 : i32
    return %c0_i32, %arg1 : i32, i32
  }
  func.func @transform_3(%arg0: i32, %arg1: i32) -> (i32, i32) {
    %c0_i32 = arith.constant 0 : i32
    %c0_i32_0 = arith.constant 0 : i32
    return %c0_i32, %arg1 : i32, i32
  }
  func.func @transform_4(%arg0: i32, %arg1: i32) -> (i32, i32) {
    %c0_i32 = arith.constant 0 : i32
    return %arg0, %arg1 : i32, i32
  }
}

</mosaic_0001>

<llo_original>
// kernel: gamma_forward.1
$region0: #{gamma_forward.1}
  #allocation0 [shape = 'u32[]', space=smem, size = 0x4, offset = 0x4, fixed_abs, tag = 'smem constant byte address 0x4 - core index']
  #allocation1 [shape = 'u32[144,128]{1,0:T(1,128)}', space=vmem, size = 0x12000, scoped, tag = 'internal scratch']
  %s0 = inlined_call_operand.vmem [shape: f32[8,128], index: 0, kind: input, shape index: {}]
  %s1 = inlined_call_operand.vmem [shape: f32[1,128], index: 1, kind: input, shape index: {}]
  %s2 = inlined_call_operand.vmem [shape: f32[1,128], index: 2, kind: input, shape index: {}]
  %s3 = inlined_call_operand.vmem [shape: f32[1,128], index: 3, kind: input, shape index: {}]
  %s4 = inlined_call_operand.vmem [shape: f32[8,128], index: 4, kind: output, shape index: {}]
  %s5 = sld [smem:[#allocation0]]
  $region26: #{gamma_forward.1} parent=0
    _
  %s7 = ssub.s32 1, %s5
  %s8 = scalar_select 0, %s7, %s5
  // Predicated region
  $region2: #{gamma_forward.1} parent=0 // pred_check
    _
  $region3: #{gamma_forward.1} parent=0 // pred_check_branch
    %10 = sbr.rel (0) target = $region5
  $region4: #{gamma_forward.1} parent=0 // pred_region
    _
  $region5: #{gamma_forward.1} parent=0 // pred_fallthru
    _
  // Predicated region
  $region6: #{gamma_forward.1} parent=0 // pred_check
    _
  $region7: #{gamma_forward.1} parent=0 // pred_check_branch
    %12 = sbr.rel (0) target = $region9
  $region8: #{gamma_forward.1} parent=0 // pred_region
    _
  $region9: #{gamma_forward.1} parent=0 // pred_fallthru
    _
  // Predicated region
  $region10: #{gamma_forward.1} parent=0 // pred_check
    _
  $region11: #{gamma_forward.1} parent=0 // pred_check_branch
    %14 = sbr.rel (0) target = $region13
  $region12: #{gamma_forward.1} parent=0 // pred_region
    _
  $region13: #{gamma_forward.1} parent=0 // pred_fallthru
    _
  // Predicated region
  $region14: #{gamma_forward.1} parent=0 // pred_check
    _
  $region15: #{gamma_forward.1} parent=0 // pred_check_branch
    %16 = sbr.rel (0) target = $region17
  $region16: #{gamma_forward.1} parent=0 // pred_region
    _
  $region17: #{gamma_forward.1} parent=0 // pred_fallthru
    _
  %v17 = vld [vmem:[%s0] sm:$0xff]
  %v18 = vld [vmem:[%s1] sm:$0x1]
  %v19 = vlog2.pop %v17
  %v20 = vmul.f32 %v19, 0.6931472
  %v22 = vlaneseq
  %v23 = vshrl.u32 %v22, 7
  %v24 = vsub.s32 0, %v23
  %v25 = vrot.slane %v18, %v24
  %v27 = vmul.f32 %v25, %v20
  %v28 = vld [vmem:[%s2] sm:$0x1]
  %v30 = vlaneseq
  %v31 = vshrl.u32 %v30, 7
  %v32 = vsub.s32 0, %v31
  %v33 = vrot.slane %v28, %v32
  %v35 = vmul.f32 %v33, %v17
  %v36 = vsub.f32 %v27, %v35
  %v37 = vld [vmem:[%s3] sm:$0x1]
  %v39 = vlaneseq
  %v40 = vshrl.u32 %v39, 7
  %v41 = vsub.s32 0, %v40
  %v42 = vrot.slane %v37, %v41
  %v44 = vadd.f32 %v36, %v42
  %45 = vst [vmem:[%s4] sm:$0xff] %v44
  // Predicated region
  $region18: #{gamma_forward.1} parent=0 // pred_check
    _
  $region19: #{gamma_forward.1} parent=0 // pred_check_branch
    %47 = sbr.rel (0) target = $region21
  $region20: #{gamma_forward.1} parent=0 // pred_region
    _
  $region21: #{gamma_forward.1} parent=0 // pred_fallthru
    _
  // Predicated region
  $region22: #{gamma_forward.1} parent=0 // pred_check
    _
  $region23: #{gamma_forward.1} parent=0 // pred_check_branch
    %49 = sbr.rel (0) target = $region25
  $region24: #{gamma_forward.1} parent=0 // pred_region
    _
  $region25: #{gamma_forward.1} parent=0 // pred_fallthru
    _

</llo_original>
